<compile_context>
chip_gen: v7x
topology: tpu7x:2x2x1
jax: 0.10.0
libtpu: 0.0.40
codegen_flags: <defaults>
</compile_context>

<pallas_src>
import jax
import jax.numpy as jnp
from jax.experimental import pallas as pl
from jax.experimental.pallas import tpu as pltpu

LEAKY_SLOPE = 0.01       # PyTorch nn.LeakyReLU default
LN_EPS = 1e-5            # PyTorch nn.LayerNorm default
TILE_GRANULE = 256       # MXU-N aligned on v6e/v7x, multiple of 128 for v5e
MAX_TILE_B = 2048        # fat DMA chunks; amortizes ~0.35us per-grid-step cost


def _round_up(x, m):
    return ((x + m - 1) // m) * m


def _pick_batch_tiling(batch):
    """Pick (tile_b, b_pad).

    Tiles are TILE_GRANULE-aligned and as large as possible (<= MAX_TILE_B)
    without adding padding beyond one granule; when there is more than one
    granule of work we keep >= 2 grid steps so the 'parallel' batch axis can
    shard across both v7x TensorCores.
    """
    b_pad = _round_up(max(int(batch), 1), TILE_GRANULE)
    k = b_pad // TILE_GRANULE
    if k == 1:
        return TILE_GRANULE, b_pad
    max_m = MAX_TILE_B // TILE_GRANULE
    best_m = 1
    for m in range(1, k + 1):
        if k % m == 0 and m <= max_m and (k // m) >= 2:
            best_m = m
    return best_m * TILE_GRANULE, b_pad


def _layernorm_f0(h, gamma_col, beta_col):
    """LayerNorm over the feature axis (axis 0 = sublanes), f32, one-pass stats."""
    mean = jnp.mean(h, axis=0, keepdims=True)
    var = jnp.maximum(jnp.mean(h * h, axis=0, keepdims=True) - mean * mean, 0.0)
    return (h - mean) * jax.lax.rsqrt(var + LN_EPS) * gamma_col + beta_col


def _leaky_relu(x):
    return jnp.maximum(x, LEAKY_SLOPE * x)


def mlp_head_kernel(x_ref, w1T_ref, w2T_ref, small_ref, o_ref):
    """Fused [Linear -> LayerNorm -> LeakyReLU] x2 -> Linear(1) head.

    x_ref     : (TILE_B, d_in)     bf16  contiguous batch tile (no wrapper transpose)
    w1T_ref   : (d_model, d_in)    bf16  resident across the grid
    w2T_ref   : (d_model, d_model) bf16  resident across the grid
    small_ref : (d_model, 8)       f32   cols [b1, g1, be1, b2, g2, be2, w3, b3@row0]
    o_ref     : (1, TILE_B)        f32   lane-dense prediction row
    """
    # TODO(synk): training-mode Dropout(p=0.1) omitted; eval-mode identity used.
    small = small_ref[...]
    b1, g1, be1 = small[:, 0:1], small[:, 1:2], small[:, 2:3]
    b2, g2, be2 = small[:, 3:4], small[:, 4:5], small[:, 5:6]
    w3, b3 = small[:, 6:7], small[0:1, 7:8]

    # Layer 1 on the MXU: contract d_in of both operands -> (d_model, TILE_B).
    # Equivalent to W1^T @ X^T with no physical transpose of the batch tile.
    h = jax.lax.dot_general(
        w1T_ref[...], x_ref[...],
        dimension_numbers=(((1,), (1,)), ((), ())),
        preferred_element_type=jnp.float32) + b1
    h = _leaky_relu(_layernorm_f0(h, g1, be1))

    # Layer 2: (d_model, d_model) @ (d_model, TILE_B), f32 accumulation.
    h = jnp.dot(w2T_ref[...], h.astype(jnp.bfloat16),
                preferred_element_type=jnp.float32) + b2
    h = _leaky_relu(_layernorm_f0(h, g2, be2))

    # Head (out_features = 1): VPU multiply + sublane reduce -> (1, TILE_B).
    o_ref[...] = (jnp.sum(h * w3, axis=0, keepdims=True) + b3).astype(o_ref.dtype)


def mlp_head(x, w1T, w2T, small, *, tile_b):
    """x: (B_pad, d_in) bf16, B_pad % tile_b == 0. Returns (1, B_pad) f32."""
    b_pad, d_in = x.shape
    d_model = w1T.shape[0]
    assert b_pad % tile_b == 0
    return pl.pallas_call(
        mlp_head_kernel,
        out_shape=jax.ShapeDtypeStruct((1, b_pad), jnp.float32),
        grid=(b_pad // tile_b,),
        in_specs=[
            pl.BlockSpec((tile_b, d_in), lambda i: (i, 0)),      # batch tile (pipelined)
            # NOTE: if d_model/d_in are ever scaled to production sizes, add
            # pipeline_mode=pl.Buffered(1) on the two resident-weight specs and
            # set vmem_limit_bytes explicitly (matters on v7x's 64 MiB VMEM).
            pl.BlockSpec((d_model, d_in), lambda i: (0, 0)),     # resident weights
            pl.BlockSpec((d_model, d_model), lambda i: (0, 0)),  # resident weights
            pl.BlockSpec((d_model, 8), lambda i: (0, 0)),        # packed small params
        ],
        out_specs=pl.BlockSpec((1, tile_b), lambda i: (0, i)),   # lane-dense output row
        compiler_params=pltpu.CompilerParams(
            dimension_semantics=("parallel",),                   # megacore sharding on v7x
        ),
    )(x, w1T, w2T, small)


def init_params(key, n_col, embed_dim_meta_feature, d_model):
    """Deterministic synthetic parameters matching meta_predictor.__init__ shapes."""
    embedding_dim = embed_dim_meta_feature // len(n_col)
    embed_dim_component = len(n_col) * embedding_dim
    d_in = embed_dim_component + embed_dim_meta_feature

    keys = jax.random.split(key, len(n_col) + 3)

    # nn.Embedding tables, stored bf16 so the gather+concat writes bf16.
    emb_tables = [
        (jax.random.normal(keys[i], (int(n), embedding_dim), jnp.float32) * 0.1
         ).astype(jnp.bfloat16)
        for i, n in enumerate(n_col)
    ]

    def linear(k, fan_in, fan_out):
        kw, kb = jax.random.split(k)
        bound = 1.0 / float(fan_in) ** 0.5
        w = jax.random.uniform(kw, (fan_in, fan_out), jnp.float32, -bound, bound)
        b = jax.random.uniform(kb, (fan_out,), jnp.float32, -bound, bound)
        return w, b

    w1, b1 = linear(keys[-3], d_in, d_model)
    w2, b2 = linear(keys[-2], d_model, d_model)
    w3, b3 = linear(keys[-1], d_model, 1)

    # Pack all small per-feature vectors into one (d_model, 8) column buffer.
    small = jnp.zeros((d_model, 8), jnp.float32)
    small = small.at[:, 0].set(b1)         # Linear1 bias
    small = small.at[:, 1].set(1.0)        # LN1 gamma
    small = small.at[:, 2].set(0.0)        # LN1 beta
    small = small.at[:, 3].set(b2)         # Linear2 bias
    small = small.at[:, 4].set(1.0)        # LN2 gamma
    small = small.at[:, 5].set(0.0)        # LN2 beta
    small = small.at[:, 6].set(w3[:, 0])   # head weight column
    small = small.at[0, 7].set(b3[0])      # head bias scalar

    params = dict(
        w1T=jnp.asarray(w1.T, jnp.bfloat16),   # (d_model, d_in)
        w2T=jnp.asarray(w2.T, jnp.bfloat16),   # (d_model, d_model)
        small=small,                           # (d_model, 8) f32
    )
    return emb_tables, params


def meta_predictor_forward(components, meta_feature, emb_tables, params):
    """components: (B, n_cols) int32, meta_feature: (B, F) f32.

    Returns (component_embedding, pred) like the PyTorch module
    (component_embedding is bf16 here; the activation stream is bf16 end to end).
    """
    # Embedding lookups (gathers) stay in plain-JAX glue; component_embedding
    # is a module output so it must land in HBM regardless.
    component_embedding = jnp.concatenate(
        [jnp.take(tbl, components[:, i], axis=0) for i, tbl in enumerate(emb_tables)],
        axis=1,
    )                                                            # (B, d_comp) bf16
    embedding = jnp.concatenate(
        [component_embedding, meta_feature.astype(jnp.bfloat16)], axis=1
    )                                                            # (B, d_in) bf16

    B = embedding.shape[0]
    tile_b, b_pad = _pick_batch_tiling(B)

    # No wrapper-side transpose/cast materialization: the kernel consumes
    # contiguous (tile_b, d_in) row tiles directly; only a fused row pad remains.
    x = jnp.pad(embedding, ((0, b_pad - B), (0, 0)))             # (b_pad, d_in) bf16

    pred_row = mlp_head(x, params["w1T"], params["w2T"], params["small"],
                        tile_b=tile_b)                           # (1, b_pad) f32
    pred = pred_row[0, :B].reshape(B, 1)
    return component_embedding, pred


def _reference_pred(embedding_bf16, params):
    """Pure-JAX reference with the same bf16 rounding points as the kernel."""
    x = embedding_bf16.astype(jnp.float32)
    w1 = params["w1T"].astype(jnp.float32).T
    w2 = params["w2T"].astype(jnp.float32).T
    small = params["small"]
    b1, g1, be1 = small[:, 0], small[:, 1], small[:, 2]
    b2, g2, be2 = small[:, 3], small[:, 4], small[:, 5]
    w3, b3 = small[:, 6], small[0, 7]

    def ln(h, g, be):
        mean = jnp.mean(h, axis=-1, keepdims=True)
        var = jnp.mean((h - mean) ** 2, axis=-1, keepdims=True)
        return (h - mean) * jax.lax.rsqrt(var + LN_EPS) * g + be

    def lrelu(h):
        return jnp.maximum(h, LEAKY_SLOPE * h)

    h = lrelu(ln(x @ w1 + b1, g1, be1))
    h = h.astype(jnp.bfloat16).astype(jnp.float32)
    h = lrelu(ln(h @ w2 + b2, g2, be2))
    return (h @ w3 + b3)[:, None]


if __name__ == "__main__":
    # Small, module-consistent shapes.
    n_col = [5, 7, 11, 13]          # 4 categorical columns
    embed_dim_meta_feature = 24     # -> embedding_dim = 6, component dim = 24, d_in = 48
    d_model = 32
    B = 8

    key = jax.random.PRNGKey(0)
    k_params, k_comp, k_meta = jax.random.split(key, 3)

    emb_tables, params = init_params(k_params, n_col, embed_dim_meta_feature, d_model)

    comp_keys = jax.random.split(k_comp, len(n_col))
    components = jnp.stack(
        [jax.random.randint(comp_keys[i], (B,), 0, n_col[i], dtype=jnp.int32)
         for i in range(len(n_col))],
        axis=1,
    )  # (B, 4) int32
    meta_feature = jax.random.normal(k_meta, (B, embed_dim_meta_feature), dtype=jnp.float32)

    fwd = jax.jit(meta_predictor_forward)
    component_embedding, pred = fwd(components, meta_feature, emb_tables, params)
    jax.block_until_ready((component_embedding, pred))

    # Sanity check against a pure-JAX reference with matching rounding points.
    embedding = jnp.concatenate(
        [jnp.take(tbl, components[:, i], axis=0) for i, tbl in enumerate(emb_tables)]
        + [meta_feature.astype(jnp.bfloat16)], axis=1)
    pred_ref = _reference_pred(embedding, params)

    assert component_embedding.shape == (B, len(n_col) * (embed_dim_meta_feature // len(n_col)))
    assert pred.shape == (B, 1)
    assert bool(jnp.all(jnp.isfinite(pred)))
    assert bool(jnp.allclose(pred, pred_ref, atol=3e-2, rtol=0.0))
    print("KERNEL_OK")
</pallas_src>

<mosaic_0001>
module attributes {stable_mosaic.version = 11 : i64} {
  func.func @mlp_head_kernel(%arg0: i32, %arg1: memref<256x48xbf16, #tpu.memory_space<vmem>>, %arg2: memref<32x48xbf16, #tpu.memory_space<vmem>>, %arg3: memref<32x32xbf16, #tpu.memory_space<vmem>>, %arg4: memref<32x8xf32, #tpu.memory_space<vmem>>, %arg5: memref<1x256xf32, #tpu.memory_space<vmem>>) attributes {dimension_semantics = [#tpu.dimension_semantics<parallel>], iteration_bounds = array<i64: 1>, scalar_prefetch = 0 : i64, scratch_operands = 0 : i64, tpu.core_type = #tpu.core_type<tc>, window_params = [{transform_indices = @transform_0, window_bounds = array<i64: 256, 48>}, {pipeline_mode = #tpu.pipeline_mode<synchronous>, transform_indices = @transform_1, window_bounds = array<i64: 32, 48>}, {pipeline_mode = #tpu.pipeline_mode<synchronous>, transform_indices = @transform_2, window_bounds = array<i64: 32, 32>}, {pipeline_mode = #tpu.pipeline_mode<synchronous>, transform_indices = @transform_3, window_bounds = array<i64: 32, 8>}, {transform_indices = @transform_4, window_bounds = array<i64: 1, 256>}]} {
    %c0 = arith.constant 0 : index
    %c0_0 = arith.constant 0 : index
    %0 = vector.load %arg4[%c0, %c0_0] : memref<32x8xf32, #tpu.memory_space<vmem>>, vector<32x8xf32>
    %1 = vector.extract_strided_slice %0 {offsets = [0, 0], sizes = [32, 1], strides = [1, 1]} : vector<32x8xf32> to vector<32x1xf32>
    %2 = vector.extract_strided_slice %0 {offsets = [0, 1], sizes = [32, 1], strides = [1, 1]} : vector<32x8xf32> to vector<32x1xf32>
    %3 = vector.extract_strided_slice %0 {offsets = [0, 2], sizes = [32, 1], strides = [1, 1]} : vector<32x8xf32> to vector<32x1xf32>
    %4 = vector.extract_strided_slice %0 {offsets = [0, 3], sizes = [32, 1], strides = [1, 1]} : vector<32x8xf32> to vector<32x1xf32>
    %5 = vector.extract_strided_slice %0 {offsets = [0, 4], sizes = [32, 1], strides = [1, 1]} : vector<32x8xf32> to vector<32x1xf32>
    %6 = vector.extract_strided_slice %0 {offsets = [0, 5], sizes = [32, 1], strides = [1, 1]} : vector<32x8xf32> to vector<32x1xf32>
    %7 = vector.extract_strided_slice %0 {offsets = [0, 6], sizes = [32, 1], strides = [1, 1]} : vector<32x8xf32> to vector<32x1xf32>
    %8 = vector.extract_strided_slice %0 {offsets = [0, 7], sizes = [1, 1], strides = [1, 1]} : vector<32x8xf32> to vector<1x1xf32>
    %c0_1 = arith.constant 0 : index
    %c0_2 = arith.constant 0 : index
    %9 = vector.load %arg2[%c0_1, %c0_2] : memref<32x48xbf16, #tpu.memory_space<vmem>>, vector<32x48xbf16>
    %c0_3 = arith.constant 0 : index
    %c0_4 = arith.constant 0 : index
    %10 = vector.load %arg1[%c0_3, %c0_4] : memref<256x48xbf16, #tpu.memory_space<vmem>>, vector<256x48xbf16>
    %cst = arith.constant dense<0.000000e+00> : vector<32x256xf32>
    %11 = tpu.matmul %9, %10, %cst {dimension_numbers = #tpu.dot_dimension_numbers<[1], [1], [0], [0], [0, 0, 1, 0], [], []>} : vector<32x48xbf16>, vector<256x48xbf16>, vector<32x256xf32> -> vector<32x256xf32>
    %12 = vector.broadcast %1 : vector<32x1xf32> to vector<32x256xf32>
    %13 = arith.addf %11, %12 : vector<32x256xf32>
    %cst_5 = arith.constant dense<0.000000e+00> : vector<256xf32>
    %14 = vector.multi_reduction <add>, %13, %cst_5 [0] : vector<32x256xf32> to vector<256xf32>
    %15 = vector.shape_cast %14 : vector<256xf32> to vector<1x256xf32>
    %cst_6 = arith.constant 3.200000e+01 : f32
    %16 = vector.broadcast %cst_6 : f32 to vector<1x256xf32>
    %17 = arith.divf %15, %16 : vector<1x256xf32>
    %18 = arith.mulf %13, %13 : vector<32x256xf32>
    %cst_7 = arith.constant dense<0.000000e+00> : vector<256xf32>
    %19 = vector.multi_reduction <add>, %18, %cst_7 [0] : vector<32x256xf32> to vector<256xf32>
    %20 = vector.shape_cast %19 : vector<256xf32> to vector<1x256xf32>
    %cst_8 = arith.constant 3.200000e+01 : f32
    %21 = vector.broadcast %cst_8 : f32 to vector<1x256xf32>
    %22 = arith.divf %20, %21 : vector<1x256xf32>
    %23 = arith.mulf %17, %17 : vector<1x256xf32>
    %24 = arith.subf %22, %23 : vector<1x256xf32>
    %cst_9 = arith.constant 0.000000e+00 : f32
    %25 = vector.broadcast %cst_9 : f32 to vector<1x256xf32>
    %26 = arith.maximumf %24, %25 : vector<1x256xf32>
    %27 = vector.broadcast %17 : vector<1x256xf32> to vector<32x256xf32>
    %28 = arith.subf %13, %27 : vector<32x256xf32>
    %cst_10 = arith.constant 9.99999974E-6 : f32
    %29 = vector.broadcast %cst_10 : f32 to vector<1x256xf32>
    %30 = arith.addf %26, %29 : vector<1x256xf32>
    %31 = math.rsqrt %30 : vector<1x256xf32>
    %32 = vector.broadcast %31 : vector<1x256xf32> to vector<32x256xf32>
    %33 = arith.mulf %28, %32 : vector<32x256xf32>
    %34 = vector.broadcast %2 : vector<32x1xf32> to vector<32x256xf32>
    %35 = arith.mulf %33, %34 : vector<32x256xf32>
    %36 = vector.broadcast %3 : vector<32x1xf32> to vector<32x256xf32>
    %37 = arith.addf %35, %36 : vector<32x256xf32>
    %cst_11 = arith.constant 0.00999999977 : f32
    %38 = vector.broadcast %cst_11 : f32 to vector<32x256xf32>
    %39 = arith.mulf %38, %37 : vector<32x256xf32>
    %40 = arith.maximumf %37, %39 : vector<32x256xf32>
    %c0_12 = arith.constant 0 : index
    %c0_13 = arith.constant 0 : index
    %41 = vector.load %arg3[%c0_12, %c0_13] : memref<32x32xbf16, #tpu.memory_space<vmem>>, vector<32x32xbf16>
    %42 = arith.truncf %40 : vector<32x256xf32> to vector<32x256xbf16>
    %cst_14 = arith.constant dense<0.000000e+00> : vector<32x256xf32>
    %43 = tpu.matmul %41, %42, %cst_14 {dimension_numbers = #tpu.dot_dimension_numbers<[1], [0], [0], [1], [0, 0, 1, 1], [], []>} : vector<32x32xbf16>, vector<32x256xbf16>, vector<32x256xf32> -> vector<32x256xf32>
    %44 = vector.broadcast %4 : vector<32x1xf32> to vector<32x256xf32>
    %45 = arith.addf %43, %44 : vector<32x256xf32>
    %cst_15 = arith.constant dense<0.000000e+00> : vector<256xf32>
    %46 = vector.multi_reduction <add>, %45, %cst_15 [0] : vector<32x256xf32> to vector<256xf32>
    %47 = vector.shape_cast %46 : vector<256xf32> to vector<1x256xf32>
    %cst_16 = arith.constant 3.200000e+01 : f32
    %48 = vector.broadcast %cst_16 : f32 to vector<1x256xf32>
    %49 = arith.divf %47, %48 : vector<1x256xf32>
    %50 = arith.mulf %45, %45 : vector<32x256xf32>
    %cst_17 = arith.constant dense<0.000000e+00> : vector<256xf32>
    %51 = vector.multi_reduction <add>, %50, %cst_17 [0] : vector<32x256xf32> to vector<256xf32>
    %52 = vector.shape_cast %51 : vector<256xf32> to vector<1x256xf32>
    %cst_18 = arith.constant 3.200000e+01 : f32
    %53 = vector.broadcast %cst_18 : f32 to vector<1x256xf32>
    %54 = arith.divf %52, %53 : vector<1x256xf32>
    %55 = arith.mulf %49, %49 : vector<1x256xf32>
    %56 = arith.subf %54, %55 : vector<1x256xf32>
    %cst_19 = arith.constant 0.000000e+00 : f32
    %57 = vector.broadcast %cst_19 : f32 to vector<1x256xf32>
    %58 = arith.maximumf %56, %57 : vector<1x256xf32>
    %59 = vector.broadcast %49 : vector<1x256xf32> to vector<32x256xf32>
    %60 = arith.subf %45, %59 : vector<32x256xf32>
    %cst_20 = arith.constant 9.99999974E-6 : f32
    %61 = vector.broadcast %cst_20 : f32 to vector<1x256xf32>
    %62 = arith.addf %58, %61 : vector<1x256xf32>
    %63 = math.rsqrt %62 : vector<1x256xf32>
    %64 = vector.broadcast %63 : vector<1x256xf32> to vector<32x256xf32>
    %65 = arith.mulf %60, %64 : vector<32x256xf32>
    %66 = vector.broadcast %5 : vector<32x1xf32> to vector<32x256xf32>
    %67 = arith.mulf %65, %66 : vector<32x256xf32>
    %68 = vector.broadcast %6 : vector<32x1xf32> to vector<32x256xf32>
    %69 = arith.addf %67, %68 : vector<32x256xf32>
    %cst_21 = arith.constant 0.00999999977 : f32
    %70 = vector.broadcast %cst_21 : f32 to vector<32x256xf32>
    %71 = arith.mulf %70, %69 : vector<32x256xf32>
    %72 = arith.maximumf %69, %71 : vector<32x256xf32>
    %73 = vector.broadcast %7 : vector<32x1xf32> to vector<32x256xf32>
    %74 = arith.mulf %72, %73 : vector<32x256xf32>
    %cst_22 = arith.constant dense<0.000000e+00> : vector<256xf32>
    %75 = vector.multi_reduction <add>, %74, %cst_22 [0] : vector<32x256xf32> to vector<256xf32>
    %76 = vector.shape_cast %75 : vector<256xf32> to vector<1x256xf32>
    %77 = vector.broadcast %8 : vector<1x1xf32> to vector<1x256xf32>
    %78 = arith.addf %76, %77 : vector<1x256xf32>
    %c0_23 = arith.constant 0 : index
    %c0_24 = arith.constant 0 : index
    %79 = vector.load %arg5[%c0_23, %c0_24] : memref<1x256xf32, #tpu.memory_space<vmem>>, vector<1x256xf32>
    tpu.vector_store %arg5[%c0_23, %c0_24], %78 {strides = array<i32>} : memref<1x256xf32, #tpu.memory_space<vmem>>, vector<1x256xf32>,
    return
  }
  func.func @transform_0(%arg0: i32) -> (i32, i32) {
    %c0_i32 = arith.constant 0 : i32
    %c0_i32_0 = arith.constant 0 : i32
    return %arg0, %c0_i32 : i32, i32
  }
  func.func @transform_1(%arg0: i32) -> (i32, i32) {
    %c0_i32 = arith.constant 0 : i32
    %c0_i32_0 = arith.constant 0 : i32
    %c0_i32_1 = arith.constant 0 : i32
    return %c0_i32, %c0_i32_0 : i32, i32
  }
  func.func @transform_2(%arg0: i32) -> (i32, i32) {
    %c0_i32 = arith.constant 0 : i32
    %c0_i32_0 = arith.constant 0 : i32
    %c0_i32_1 = arith.constant 0 : i32
    return %c0_i32, %c0_i32_0 : i32, i32
  }
  func.func @transform_3(%arg0: i32) -> (i32, i32) {
    %c0_i32 = arith.constant 0 : i32
    %c0_i32_0 = arith.constant 0 : i32
    %c0_i32_1 = arith.constant 0 : i32
    return %c0_i32, %c0_i32_0 : i32, i32
  }
  func.func @transform_4(%arg0: i32) -> (i32, i32) {
    %c0_i32 = arith.constant 0 : i32
    %c0_i32_0 = arith.constant 0 : i32
    return %c0_i32, %arg0 : i32, i32
  }
}

</mosaic_0001>

<llo_original>
// kernel: meta_predictor_forward.1
$region0: #{meta_predictor_forward.1}
  #allocation0 [shape = 'u32[]', space=smem, size = 0x4, offset = 0x4, fixed_abs, tag = 'smem constant byte address 0x4 - core index']
  #allocation1 [shape = 'u32[144,128]{1,0:T(1,128)}', space=vmem, size = 0x12000, scoped, tag = 'internal scratch']
  %s0 = inlined_call_operand.vmem [shape: bf16[256,48], index: 0, kind: input, shape index: {}]
  %s1 = inlined_call_operand.vmem [shape: bf16[32,48], index: 1, kind: input, shape index: {}]
  %s2 = inlined_call_operand.vmem [shape: bf16[32,32], index: 2, kind: input, shape index: {}]
  %s3 = inlined_call_operand.vmem [shape: f32[32,8], index: 3, kind: input, shape index: {}]
  %s4 = inlined_call_operand.vmem [shape: f32[1,256], index: 4, kind: output, shape index: {}]
  %s5 = sld [smem:[#allocation0]]
  $region26: #{meta_predictor_forward.1} parent=0
    _
  %s7 = ssub.s32 1, %s5
  %s8 = scalar_select 0, %s7, %s5
  // Predicated region
  $region2: #{meta_predictor_forward.1} parent=0 // pred_check
    _
  $region3: #{meta_predictor_forward.1} parent=0 // pred_check_branch
    %10 = sbr.rel (0) target = $region5
  $region4: #{meta_predictor_forward.1} parent=0 // pred_region
    _
  $region5: #{meta_predictor_forward.1} parent=0 // pred_fallthru
    _
  // Predicated region
  $region6: #{meta_predictor_forward.1} parent=0 // pred_check
    _
  $region7: #{meta_predictor_forward.1} parent=0 // pred_check_branch
    %12 = sbr.rel (0) target = $region9
  $region8: #{meta_predictor_forward.1} parent=0 // pred_region
    _
  $region9: #{meta_predictor_forward.1} parent=0 // pred_fallthru
    _
  // Predicated region
  $region10: #{meta_predictor_forward.1} parent=0 // pred_check
    _
  $region11: #{meta_predictor_forward.1} parent=0 // pred_check_branch
    %14 = sbr.rel (0) target = $region13
  $region12: #{meta_predictor_forward.1} parent=0 // pred_region
    _
  $region13: #{meta_predictor_forward.1} parent=0 // pred_fallthru
    _
  // Predicated region
  $region14: #{meta_predictor_forward.1} parent=0 // pred_check
    _
  $region15: #{meta_predictor_forward.1} parent=0 // pred_check_branch
    %16 = sbr.rel (0) target = $region17
  $region16: #{meta_predictor_forward.1} parent=0 // pred_region
    _
  $region17: #{meta_predictor_forward.1} parent=0 // pred_fallthru
    _
  %v18 = vld [vmem:[%s3] sm:$0xff]
  %v19 = vld [vmem:[%s3 + $0x8] sm:$0xff]
  %v20 = vld [vmem:[%s3 + $0x10] sm:$0xff]
  %v21 = vld [vmem:[%s3 + $0x18] sm:$0xff]
  %v22 = vld [vmem:[%s1] sm:$0xf]
  %v23 = vld [vmem:[%s1 + $0x4] sm:$0xf]
  %v24 = vld [vmem:[%s1 + $0x8] sm:$0xf]
  %v25 = vld [vmem:[%s1 + $0xc] sm:$0xf]
  %v26 = vld [vmem:[%s0] sm:$0xf]
  %v27 = vld [vmem:[%s0 + $0x4] sm:$0xf]
  %v28 = vld [vmem:[%s0 + $0x8] sm:$0xf]
  %v29 = vld [vmem:[%s0 + $0xc] sm:$0xf]
  %v30 = vld [vmem:[%s0 + $0x10] sm:$0xf]
  %v31 = vld [vmem:[%s0 + $0x14] sm:$0xf]
  %v32 = vld [vmem:[%s0 + $0x18] sm:$0xf]
  %v33 = vld [vmem:[%s0 + $0x1c] sm:$0xf]
  %v34 = vld [vmem:[%s0 + $0x20] sm:$0xf]
  %v35 = vld [vmem:[%s0 + $0x24] sm:$0xf]
  %v36 = vld [vmem:[%s0 + $0x28] sm:$0xf]
  %v37 = vld [vmem:[%s0 + $0x2c] sm:$0xf]
  %v38 = vld [vmem:[%s0 + $0x30] sm:$0xf]
  %v39 = vld [vmem:[%s0 + $0x34] sm:$0xf]
  %v40 = vld [vmem:[%s0 + $0x38] sm:$0xf]
  %v41 = vld [vmem:[%s0 + $0x3c] sm:$0xf]
  %v42 = vld [vmem:[%s0 + $0x40] sm:$0xf]
  %v43 = vld [vmem:[%s0 + $0x44] sm:$0xf]
  %v44 = vld [vmem:[%s0 + $0x48] sm:$0xf]
  %v45 = vld [vmem:[%s0 + $0x4c] sm:$0xf]
  %v46 = vld [vmem:[%s0 + $0x50] sm:$0xf]
  %v47 = vld [vmem:[%s0 + $0x54] sm:$0xf]
  %v48 = vld [vmem:[%s0 + $0x58] sm:$0xf]
  %v49 = vld [vmem:[%s0 + $0x5c] sm:$0xf]
  %v50 = vld [vmem:[%s0 + $0x60] sm:$0xf]
  %v51 = vld [vmem:[%s0 + $0x64] sm:$0xf]
  %v52 = vld [vmem:[%s0 + $0x68] sm:$0xf]
  %v53 = vld [vmem:[%s0 + $0x6c] sm:$0xf]
  %v54 = vld [vmem:[%s0 + $0x70] sm:$0xf]
  %v55 = vld [vmem:[%s0 + $0x74] sm:$0xf]
  %v56 = vld [vmem:[%s0 + $0x78] sm:$0xf]
  %v57 = vld [vmem:[%s0 + $0x7c] sm:$0xf]
  %59 = vset.pattern.permute.xlu0 0
  %60 = vperm.xlu0 %59, %v18
  %v61 = vpop.permute.xlu0 %60
  %64 = vset.pattern.permute.xlu0 0
  %65 = vperm.xlu0 %64, %v19
  %v66 = vpop.permute.xlu0 %65
  %69 = vset.pattern.permute.xlu0 0
  %70 = vperm.xlu0 %69, %v20
  %v71 = vpop.permute.xlu0 %70
  %74 = vset.pattern.permute.xlu0 0
  %75 = vperm.xlu0 %74, %v21
  %v76 = vpop.permute.xlu0 %75
  %v82 = vunpack.c.l.b16 %v22
  %v83 = vunpack.c.l.b16 %v23
  %v84 = vunpack.c.l.b16 %v24
  %v85 = vunpack.c.l.b16 %v25
  %v86 = vpack.c.b16 %v83, %v82
  %v87 = vpack.c.b16 %v85, %v84
  %v120 = vunpack.c.l.b16 %v26
  %v121 = vunpack.c.l.b16 %v27
  %v122 = vunpack.c.l.b16 %v28
  %v123 = vunpack.c.l.b16 %v29
  %v124 = vunpack.c.l.b16 %v30
  %v125 = vunpack.c.l.b16 %v31
  %v126 = vunpack.c.l.b16 %v32
  %v127 = vunpack.c.l.b16 %v33
  %v128 = vunpack.c.l.b16 %v34
  %v129 = vunpack.c.l.b16 %v35
  %v130 = vunpack.c.l.b16 %v36
  %v131 = vunpack.c.l.b16 %v37
  %v132 = vunpack.c.l.b16 %v38
  %v133 = vunpack.c.l.b16 %v39
  %v134 = vunpack.c.l.b16 %v40
  %v135 = vunpack.c.l.b16 %v41
  %v136 = vunpack.c.l.b16 %v42
  %v137 = vunpack.c.l.b16 %v43
  %v138 = vunpack.c.l.b16 %v44
  %v139 = vunpack.c.l.b16 %v45
  %v140 = vunpack.c.l.b16 %v46
  %v141 = vunpack.c.l.b16 %v47
  %v142 = vunpack.c.l.b16 %v48
  %v143 = vunpack.c.l.b16 %v49
  %v144 = vunpack.c.l.b16 %v50
  %v145 = vunpack.c.l.b16 %v51
  %v146 = vunpack.c.l.b16 %v52
  %v147 = vunpack.c.l.b16 %v53
  %v148 = vunpack.c.l.b16 %v54
  %v149 = vunpack.c.l.b16 %v55
  %v150 = vunpack.c.l.b16 %v56
  %v151 = vunpack.c.l.b16 %v57
  %v152 = vpack.c.b16 %v121, %v120
  %v153 = vpack.c.b16 %v123, %v122
  %v154 = vpack.c.b16 %v125, %v124
  %v155 = vpack.c.b16 %v127, %v126
  %v156 = vpack.c.b16 %v129, %v128
  %v157 = vpack.c.b16 %v131, %v130
  %v158 = vpack.c.b16 %v133, %v132
  %v159 = vpack.c.b16 %v135, %v134
  %v160 = vpack.c.b16 %v137, %v136
  %v161 = vpack.c.b16 %v139, %v138
  %v162 = vpack.c.b16 %v141, %v140
  %v163 = vpack.c.b16 %v143, %v142
  %v164 = vpack.c.b16 %v145, %v144
  %v165 = vpack.c.b16 %v147, %v146
  %v166 = vpack.c.b16 %v149, %v148
  %v167 = vpack.c.b16 %v151, %v150
  %vm168 = vcmask 392192
  %v170 = vsel %vm168, %v86, 0
  %v173 = vsel %vm168, %v87, 0
  %v176 = vsel %vm168, %v152, 0
  %v179 = vsel %vm168, %v153, 0
  %v182 = vsel %vm168, %v154, 0
  %v185 = vsel %vm168, %v155, 0
  %v188 = vsel %vm168, %v156, 0
  %v191 = vsel %vm168, %v157, 0
  %v194 = vsel %vm168, %v158, 0
  %v197 = vsel %vm168, %v159, 0
  %v200 = vsel %vm168, %v160, 0
  %v203 = vsel %vm168, %v161, 0
  %v206 = vsel %vm168, %v162, 0
  %v209 = vsel %vm168, %v163, 0
  %v212 = vsel %vm168, %v164, 0
  %v215 = vsel %vm168, %v165, 0
  %v218 = vsel %vm168, %v166, 0
  %v221 = vsel %vm168, %v167, 0
  %223 = vmatprep.subr.bf16.mxu0 0
  %224 = vmatpush1.bf16.xpose.msra.mxu0 %v176
  %225 = vmatprep.subr.bf16.mxu0 0
  %226 = vmatpush1.bf16.xpose.msra.mxu0 %v179
  %227 = vmatprep.subr.bf16.mxu0 0
  %228 = vmatpush1.bf16.xpose.msra.mxu0 %v182
  %229 = vmatprep.subr.bf16.mxu0 0
  %230 = vmatpush1.bf16.xpose.msra.mxu0 %v185
  %231 = vmatprep.subr.bf16.mxu0 0
  %232 = vmatpush1.bf16.xpose.msra.mxu0 %v188
  %233 = vmatprep.subr.bf16.mxu0 0
  %234 = vmatpush1.bf16.xpose.msra.mxu0 %v191
  %235 = vmatprep.subr.bf16.mxu0 0
  %236 = vmatpush1.bf16.xpose.msra.mxu0 %v194
  %237 = vmatprep.subr.bf16.mxu0 0
  %238 = vmatpush1.bf16.xpose.msra.mxu0 %v197
  %239 = vmatprep.subr.bf16.mxu0 0
  %240 = vmatpush1.bf16.xpose.msra.mxu0 %v200
  %241 = vmatprep.subr.bf16.mxu0 0
  %242 = vmatpush1.bf16.xpose.msra.mxu0 %v203
  %243 = vmatprep.subr.bf16.mxu0 0
  %244 = vmatpush1.bf16.xpose.msra.mxu0 %v206
  %245 = vmatprep.subr.bf16.mxu0 0
  %246 = vmatpush1.bf16.xpose.msra.mxu0 %v209
  %247 = vmatprep.subr.bf16.mxu0 0
  %248 = vmatpush1.bf16.xpose.msra.mxu0 %v212
  %249 = vmatprep.subr.bf16.mxu0 0
  %250 = vmatpush1.bf16.xpose.msra.mxu0 %v215
  %251 = vmatprep.subr.bf16.mxu0 0
  %252 = vmatpush1.bf16.xpose.msra.mxu0 %v218
  %253 = vmatprep.subr.bf16.mxu0 0
  %254 = vmatpush1.bf16.xpose.msra.mxu0 %v221
  %255 = vmatprep.mubr.bf16.mxu0 0
  %256 = vmatmul.mubr.bf16.gmra.mrb[0].mxu0 %v170
  %v257 = vpop.f32.mrb[0].mxu0
  %v258 = vadd.f32 %v61, %v257
  %v259 = vpop.f32.mrb[0].mxu0
  %v260 = vadd.f32 %v61, %v259
  %v261 = vpop.f32.mrb[0].mxu0
  %v262 = vadd.f32 %v66, %v261
  %v263 = vpop.f32.mrb[0].mxu0
  %v264 = vadd.f32 %v66, %v263
  %265 = vmatprep.mubr.bf16.mxu0 0
  %266 = vmatmul.mubr.bf16.gmra.mrb[0].mxu0 %v173
  %v267 = vpop.f32.mrb[0].mxu0
  %v268 = vadd.f32 %v71, %v267
  %v269 = vpop.f32.mrb[0].mxu0
  %v270 = vadd.f32 %v71, %v269
  %v271 = vpop.f32.mrb[0].mxu0
  %v272 = vadd.f32 %v76, %v271
  %v273 = vpop.f32.mrb[0].mxu0
  %v274 = vadd.f32 %v76, %v273
  %275 = vdwg.mxu0
  %v276 = vadd.f32 %v258, %v262
  %v277 = vadd.f32 %v276, %v268
  %v278 = vadd.f32 %v277, %v272
  %v279 = vrot.slane %v278, 4
  %v280 = vadd.f32 %v278, %v279
  %v281 = vrot.slane %v280, 2
  %v282 = vadd.f32 %v280, %v281
  %v283 = vrot.slane %v282, 1
  %v284 = vadd.f32 %v282, %v283
  %v285 = vadd.f32 %v260, %v264
  %v286 = vadd.f32 %v285, %v270
  %v287 = vadd.f32 %v286, %v274
  %v288 = vrot.slane %v287, 4
  %v289 = vadd.f32 %v287, %v288
  %v290 = vrot.slane %v289, 2
  %v291 = vadd.f32 %v289, %v290
  %v292 = vrot.slane %v291, 1
  %v293 = vadd.f32 %v291, %v292
  %v294 = vrcp.pop 32.0
  %v295 = vmul.f32 %v284, %v294
  %v296 = vmul.f32 %v293, %v294
  %v297 = vmul.f32 %v258, %v258
  %v298 = vmul.f32 %v260, %v260
  %v299 = vmul.f32 %v262, %v262
  %v300 = vmul.f32 %v264, %v264
  %v301 = vmul.f32 %v268, %v268
  %v302 = vmul.f32 %v270, %v270
  %v303 = vmul.f32 %v272, %v272
  %v304 = vmul.f32 %v274, %v274
  %v305 = vadd.f32 %v297, %v299
  %v306 = vadd.f32 %v305, %v301
  %v307 = vadd.f32 %v306, %v303
  %v308 = vrot.slane %v307, 4
  %v309 = vadd.f32 %v307, %v308
  %v310 = vrot.slane %v309, 2
  %v311 = vadd.f32 %v309, %v310
  %v312 = vrot.slane %v311, 1
  %v313 = vadd.f32 %v311, %v312
  %v314 = vadd.f32 %v298, %v300
  %v315 = vadd.f32 %v314, %v302
  %v316 = vadd.f32 %v315, %v304
  %v317 = vrot.slane %v316, 4
  %v318 = vadd.f32 %v316, %v317
  %v319 = vrot.slane %v318, 2
  %v320 = vadd.f32 %v318, %v319
  %v321 = vrot.slane %v320, 1
  %v322 = vadd.f32 %v320, %v321
  %v323 = vmul.f32 %v313, %v294
  %v324 = vmul.f32 %v322, %v294
  %v325 = vmul.f32 %v295, %v295
  %v326 = vmul.f32 %v296, %v296
  %v327 = vsub.f32 %v323, %v325
  %v328 = vsub.f32 %v324, %v326
  %v329 = vmax.f32 %v327, 0.0
  %v330 = vmax.f32 %v328, 0.0
  %v331 = vsub.f32 %v258, %v295
  %v332 = vsub.f32 %v260, %v296
  %v333 = vsub.f32 %v262, %v295
  %v334 = vsub.f32 %v264, %v296
  %v335 = vsub.f32 %v268, %v295
  %v336 = vsub.f32 %v270, %v296
  %v337 = vsub.f32 %v272, %v295
  %v338 = vsub.f32 %v274, %v296
  %v339 = vadd.f32 %v329, 1e-05
  %v340 = vadd.f32 %v330, 1e-05
  %v341 = vrsqrt.pop %v339
  %v342 = vrsqrt.pop %v340
  %v343 = vmul.f32 %v331, %v341
  %v344 = vmul.f32 %v332, %v342
  %v345 = vmul.f32 %v333, %v341
  %v346 = vmul.f32 %v334, %v342
  %v347 = vmul.f32 %v335, %v341
  %v348 = vmul.f32 %v336, %v342
  %v349 = vmul.f32 %v337, %v341
  %v350 = vmul.f32 %v338, %v342
  %351 = vset.pattern.permute.xlu0 1
  %352 = vperm.xlu0 %351, %v18
  %v353 = vpop.permute.xlu0 %352
  %355 = vset.pattern.permute.xlu0 1
  %356 = vperm.xlu0 %355, %v19
  %v357 = vpop.permute.xlu0 %356
  %359 = vset.pattern.permute.xlu0 1
  %360 = vperm.xlu0 %359, %v20
  %v361 = vpop.permute.xlu0 %360
  %363 = vset.pattern.permute.xlu0 1
  %364 = vperm.xlu0 %363, %v21
  %v365 = vpop.permute.xlu0 %364
  %v367 = vmul.f32 %v343, %v353
  %v368 = vmul.f32 %v344, %v353
  %v369 = vmul.f32 %v345, %v357
  %v370 = vmul.f32 %v346, %v357
  %v371 = vmul.f32 %v347, %v361
  %v372 = vmul.f32 %v348, %v361
  %v373 = vmul.f32 %v349, %v365
  %v374 = vmul.f32 %v350, %v365
  %375 = vset.pattern.permute.xlu0 2
  %376 = vperm.xlu0 %375, %v18
  %v377 = vpop.permute.xlu0 %376
  %379 = vset.pattern.permute.xlu0 2
  %380 = vperm.xlu0 %379, %v19
  %v381 = vpop.permute.xlu0 %380
  %383 = vset.pattern.permute.xlu0 2
  %384 = vperm.xlu0 %383, %v20
  %v385 = vpop.permute.xlu0 %384
  %387 = vset.pattern.permute.xlu0 2
  %388 = vperm.xlu0 %387, %v21
  %v389 = vpop.permute.xlu0 %388
  %v391 = vadd.f32 %v367, %v377
  %v392 = vadd.f32 %v368, %v377
  %v393 = vadd.f32 %v369, %v381
  %v394 = vadd.f32 %v370, %v381
  %v395 = vadd.f32 %v371, %v385
  %v396 = vadd.f32 %v372, %v385
  %v397 = vadd.f32 %v373, %v389
  %v398 = vadd.f32 %v374, %v389
  %v399 = vmul.f32 %v391, 0.01
  %v400 = vmul.f32 %v392, 0.01
  %v401 = vmul.f32 %v393, 0.01
  %v402 = vmul.f32 %v394, 0.01
  %v403 = vmul.f32 %v395, 0.01
  %v404 = vmul.f32 %v396, 0.01
  %v405 = vmul.f32 %v397, 0.01
  %v406 = vmul.f32 %v398, 0.01
  %v407 = vmax.f32 %v391, %v399
  %v408 = vmax.f32 %v392, %v400
  %v409 = vmax.f32 %v393, %v401
  %v410 = vmax.f32 %v394, %v402
  %v411 = vmax.f32 %v395, %v403
  %v412 = vmax.f32 %v396, %v404
  %v413 = vmax.f32 %v397, %v405
  %v414 = vmax.f32 %v398, %v406
  %v415 = vld [vmem:[%s2] sm:$0xf]
  %v416 = vld [vmem:[%s2 + $0x4] sm:$0xf]
  %v417 = vld [vmem:[%s2 + $0x8] sm:$0xf]
  %v418 = vld [vmem:[%s2 + $0xc] sm:$0xf]
  %v419 = vpack.c.bf16 %v409, %v407
  %v420 = vpack.c.bf16 %v410, %v408
  %v421 = vpack.c.bf16 %v413, %v411
  %v422 = vpack.c.bf16 %v414, %v412
  %423 = vset.pattern.permute.xlu0 3
  %424 = vperm.xlu0 %423, %v18
  %v425 = vpop.permute.xlu0 %424
  %427 = vset.pattern.permute.xlu0 3
  %428 = vperm.xlu0 %427, %v19
  %v429 = vpop.permute.xlu0 %428
  %431 = vset.pattern.permute.xlu0 3
  %432 = vperm.xlu0 %431, %v20
  %v433 = vpop.permute.xlu0 %432
  %435 = vset.pattern.permute.xlu0 3
  %436 = vperm.xlu0 %435, %v21
  %v437 = vpop.permute.xlu0 %436
  %v443 = vunpack.c.l.b16 %v415
  %v444 = vunpack.c.l.b16 %v416
  %v445 = vunpack.c.l.b16 %v417
  %v446 = vunpack.c.l.b16 %v418
  %v447 = vpack.c.b16 %v444, %v443
  %v448 = vpack.c.b16 %v446, %v445
  %vm449 = vcmask 261120
  %v451 = vsel %vm449, %v447, 0
  %v454 = vsel %vm449, %v448, 0
  %456 = vmatprep.subr.bf16.mxu0 %v420
  %457 = vmatpush1.bf16.msra.mxu0 %v419
  %458 = vmatprep.subr.bf16.mxu0 %v422
  %459 = vmatpush1.bf16.msra.mxu0 %v421
  %460 = vmatprep.subr.bf16.mxu0 0
  %461 = vmatpush1.bf16.msra.mxu0 0
  %462 = vmatprep.subr.bf16.mxu0 0
  %463 = vmatpush1.bf16.msra.mxu0 0
  %464 = vmatprep.subr.bf16.mxu0 0
  %465 = vmatpush1.bf16.msra.mxu0 0
  %466 = vmatprep.subr.bf16.mxu0 0
  %467 = vmatpush1.bf16.msra.mxu0 0
  %468 = vmatprep.subr.bf16.mxu0 0
  %469 = vmatpush1.bf16.msra.mxu0 0
  %470 = vmatprep.subr.bf16.mxu0 0
  %471 = vmatpush1.bf16.msra.mxu0 0
  %472 = vmatprep.subr.bf16.mxu0 0
  %473 = vmatpush1.bf16.msra.mxu0 0
  %474 = vmatprep.subr.bf16.mxu0 0
  %475 = vmatpush1.bf16.msra.mxu0 0
  %476 = vmatprep.subr.bf16.mxu0 0
  %477 = vmatpush1.bf16.msra.mxu0 0
  %478 = vmatprep.subr.bf16.mxu0 0
  %479 = vmatpush1.bf16.msra.mxu0 0
  %480 = vmatprep.subr.bf16.mxu0 0
  %481 = vmatpush1.bf16.msra.mxu0 0
  %482 = vmatprep.subr.bf16.mxu0 0
  %483 = vmatpush1.bf16.msra.mxu0 0
  %484 = vmatprep.subr.bf16.mxu0 0
  %485 = vmatpush1.bf16.msra.mxu0 0
  %486 = vmatprep.subr.bf16.mxu0 0
  %487 = vmatpush1.bf16.msra.mxu0 0
  %488 = vmatprep.mubr.bf16.mxu0 0
  %489 = vmatmul.mubr.bf16.gmra.mrb[0].mxu0 %v451
  %v490 = vpop.f32.mrb[0].mxu0
  %v491 = vadd.f32 %v425, %v490
  %v492 = vpop.f32.mrb[0].mxu0
  %v493 = vadd.f32 %v425, %v492
  %v494 = vpop.f32.mrb[0].mxu0
  %v495 = vadd.f32 %v429, %v494
  %v496 = vpop.f32.mrb[0].mxu0
  %v497 = vadd.f32 %v429, %v496
  %498 = vmatprep.mubr.bf16.mxu0 0
  %499 = vmatmul.mubr.bf16.gmra.mrb[0].mxu0 %v454
  %v500 = vpop.f32.mrb[0].mxu0
  %v501 = vadd.f32 %v433, %v500
  %v502 = vpop.f32.mrb[0].mxu0
  %v503 = vadd.f32 %v433, %v502
  %v504 = vpop.f32.mrb[0].mxu0
  %v505 = vadd.f32 %v437, %v504
  %v506 = vpop.f32.mrb[0].mxu0
  %v507 = vadd.f32 %v437, %v506
  %508 = vdwg.mxu0
  %v509 = vadd.f32 %v491, %v495
  %v510 = vadd.f32 %v509, %v501
  %v511 = vadd.f32 %v510, %v505
  %v512 = vrot.slane %v511, 4
  %v513 = vadd.f32 %v511, %v512
  %v514 = vrot.slane %v513, 2
  %v515 = vadd.f32 %v513, %v514
  %v516 = vrot.slane %v515, 1
  %v517 = vadd.f32 %v515, %v516
  %v518 = vadd.f32 %v493, %v497
  %v519 = vadd.f32 %v518, %v503
  %v520 = vadd.f32 %v519, %v507
  %v521 = vrot.slane %v520, 4
  %v522 = vadd.f32 %v520, %v521
  %v523 = vrot.slane %v522, 2
  %v524 = vadd.f32 %v522, %v523
  %v525 = vrot.slane %v524, 1
  %v526 = vadd.f32 %v524, %v525
  %v527 = vmul.f32 %v517, %v294
  %v528 = vmul.f32 %v526, %v294
  %v529 = vmul.f32 %v491, %v491
  %v530 = vmul.f32 %v493, %v493
  %v531 = vmul.f32 %v495, %v495
  %v532 = vmul.f32 %v497, %v497
  %v533 = vmul.f32 %v501, %v501
  %v534 = vmul.f32 %v503, %v503
  %v535 = vmul.f32 %v505, %v505
  %v536 = vmul.f32 %v507, %v507
  %v537 = vadd.f32 %v529, %v531
  %v538 = vadd.f32 %v537, %v533
  %v539 = vadd.f32 %v538, %v535
  %v540 = vrot.slane %v539, 4
  %v541 = vadd.f32 %v539, %v540
  %v542 = vrot.slane %v541, 2
  %v543 = vadd.f32 %v541, %v542
  %v544 = vrot.slane %v543, 1
  %v545 = vadd.f32 %v543, %v544
  %v546 = vadd.f32 %v530, %v532
  %v547 = vadd.f32 %v546, %v534
  %v548 = vadd.f32 %v547, %v536
  %v549 = vrot.slane %v548, 4
  %v550 = vadd.f32 %v548, %v549
  %v551 = vrot.slane %v550, 2
  %v552 = vadd.f32 %v550, %v551
  %v553 = vrot.slane %v552, 1
  %v554 = vadd.f32 %v552, %v553
  %v555 = vmul.f32 %v545, %v294
  %v556 = vmul.f32 %v554, %v294
  %v557 = vmul.f32 %v527, %v527
  %v558 = vmul.f32 %v528, %v528
  %v559 = vsub.f32 %v555, %v557
  %v560 = vsub.f32 %v556, %v558
  %v561 = vmax.f32 %v559, 0.0
  %v562 = vmax.f32 %v560, 0.0
  %v563 = vsub.f32 %v491, %v527
  %v564 = vsub.f32 %v493, %v528
  %v565 = vsub.f32 %v495, %v527
  %v566 = vsub.f32 %v497, %v528
  %v567 = vsub.f32 %v501, %v527
  %v568 = vsub.f32 %v503, %v528
  %v569 = vsub.f32 %v505, %v527
  %v570 = vsub.f32 %v507, %v528
  %v571 = vadd.f32 %v561, 1e-05
  %v572 = vadd.f32 %v562, 1e-05
  %v573 = vrsqrt.pop %v571
  %v574 = vrsqrt.pop %v572
  %v575 = vmul.f32 %v563, %v573
  %v576 = vmul.f32 %v564, %v574
  %v577 = vmul.f32 %v565, %v573
  %v578 = vmul.f32 %v566, %v574
  %v579 = vmul.f32 %v567, %v573
  %v580 = vmul.f32 %v568, %v574
  %v581 = vmul.f32 %v569, %v573
  %v582 = vmul.f32 %v570, %v574
  %583 = vset.pattern.permute.xlu0 4
  %584 = vperm.xlu0 %583, %v18
  %v585 = vpop.permute.xlu0 %584
  %587 = vset.pattern.permute.xlu0 4
  %588 = vperm.xlu0 %587, %v19
  %v589 = vpop.permute.xlu0 %588
  %591 = vset.pattern.permute.xlu0 4
  %592 = vperm.xlu0 %591, %v20
  %v593 = vpop.permute.xlu0 %592
  %595 = vset.pattern.permute.xlu0 4
  %596 = vperm.xlu0 %595, %v21
  %v597 = vpop.permute.xlu0 %596
  %v599 = vmul.f32 %v575, %v585
  %v600 = vmul.f32 %v576, %v585
  %v601 = vmul.f32 %v577, %v589
  %v602 = vmul.f32 %v578, %v589
  %v603 = vmul.f32 %v579, %v593
  %v604 = vmul.f32 %v580, %v593
  %v605 = vmul.f32 %v581, %v597
  %v606 = vmul.f32 %v582, %v597
  %607 = vset.pattern.permute.xlu0 5
  %608 = vperm.xlu0 %607, %v18
  %v609 = vpop.permute.xlu0 %608
  %611 = vset.pattern.permute.xlu0 5
  %612 = vperm.xlu0 %611, %v19
  %v613 = vpop.permute.xlu0 %612
  %615 = vset.pattern.permute.xlu0 5
  %616 = vperm.xlu0 %615, %v20
  %v617 = vpop.permute.xlu0 %616
  %619 = vset.pattern.permute.xlu0 5
  %620 = vperm.xlu0 %619, %v21
  %v621 = vpop.permute.xlu0 %620
  %v623 = vadd.f32 %v599, %v609
  %v624 = vadd.f32 %v600, %v609
  %v625 = vadd.f32 %v601, %v613
  %v626 = vadd.f32 %v602, %v613
  %v627 = vadd.f32 %v603, %v617
  %v628 = vadd.f32 %v604, %v617
  %v629 = vadd.f32 %v605, %v621
  %v630 = vadd.f32 %v606, %v621
  %v631 = vmul.f32 %v623, 0.01
  %v632 = vmul.f32 %v624, 0.01
  %v633 = vmul.f32 %v625, 0.01
  %v634 = vmul.f32 %v626, 0.01
  %v635 = vmul.f32 %v627, 0.01
  %v636 = vmul.f32 %v628, 0.01
  %v637 = vmul.f32 %v629, 0.01
  %v638 = vmul.f32 %v630, 0.01
  %v639 = vmax.f32 %v623, %v631
  %v640 = vmax.f32 %v624, %v632
  %v641 = vmax.f32 %v625, %v633
  %v642 = vmax.f32 %v626, %v634
  %v643 = vmax.f32 %v627, %v635
  %v644 = vmax.f32 %v628, %v636
  %v645 = vmax.f32 %v629, %v637
  %v646 = vmax.f32 %v630, %v638
  %647 = vset.pattern.permute.xlu0 6
  %648 = vperm.xlu0 %647, %v18
  %v649 = vpop.permute.xlu0 %648
  %651 = vset.pattern.permute.xlu0 6
  %652 = vperm.xlu0 %651, %v19
  %v653 = vpop.permute.xlu0 %652
  %655 = vset.pattern.permute.xlu0 6
  %656 = vperm.xlu0 %655, %v20
  %v657 = vpop.permute.xlu0 %656
  %659 = vset.pattern.permute.xlu0 6
  %660 = vperm.xlu0 %659, %v21
  %v661 = vpop.permute.xlu0 %660
  %v663 = vmul.f32 %v639, %v649
  %v664 = vmul.f32 %v640, %v649
  %v665 = vmul.f32 %v641, %v653
  %v666 = vmul.f32 %v642, %v653
  %v667 = vmul.f32 %v643, %v657
  %v668 = vmul.f32 %v644, %v657
  %v669 = vmul.f32 %v645, %v661
  %v670 = vmul.f32 %v646, %v661
  %v671 = vadd.f32 %v663, %v665
  %v672 = vadd.f32 %v671, %v667
  %v673 = vadd.f32 %v672, %v669
  %v674 = vrot.slane %v673, 4
  %v675 = vadd.f32 %v673, %v674
  %v676 = vrot.slane %v675, 2
  %v677 = vadd.f32 %v675, %v676
  %v678 = vrot.slane %v677, 1
  %v679 = vadd.f32 %v677, %v678
  %v680 = vadd.f32 %v664, %v666
  %v681 = vadd.f32 %v680, %v668
  %v682 = vadd.f32 %v681, %v670
  %v683 = vrot.slane %v682, 4
  %v684 = vadd.f32 %v682, %v683
  %v685 = vrot.slane %v684, 2
  %v686 = vadd.f32 %v684, %v685
  %v687 = vrot.slane %v686, 1
  %v688 = vadd.f32 %v686, %v687
  %689 = vset.pattern.permute.xlu0 7
  %690 = vperm.xlu0 %689, %v18
  %v691 = vpop.permute.xlu0 %690
  %v693 = vadd.f32 %v679, %v691
  %v694 = vadd.f32 %v688, %v691
  %v697 = vcombine.low %v693, %v694
  %v699 = vunpack.c.l.s4 1966171168
  %v700 = vunpack.c.0.s8 %v699
  %v701 = vlaneseq
  %v702 = vshrl.u32 %v701, 7
  %v703 = vsub.s32 %v700, %v702
  %v704 = vrot.slane %v697, %v703
  %v706 = vunpack.c.l.s4 1966171168
  %v707 = vunpack.c.0.s8 %v706
  %v708 = vlaneseq
  %v709 = vshrl.u32 %v708, 7
  %v710 = vsub.s32 %v707, %v709
  %v711 = vrot.slane %v704, %v710
  %v713 = vlaneseq
  %vm714 = vcmp.ge.s32.totalorder %v713, 0
  %vm715 = vcmp.lt.s32.totalorder %v713, 256
  %vm716 = vmand %vm714, %vm715
  %717 = vst.msk [vmem:[%s4] sm:$0x3] %vm716, %v711
  // Predicated region
  $region18: #{meta_predictor_forward.1} parent=0 // pred_check
    _
  $region19: #{meta_predictor_forward.1} parent=0 // pred_check_branch
    %719 = sbr.rel (0) target = $region21
  $region20: #{meta_predictor_forward.1} parent=0 // pred_region
    _
  $region21: #{meta_predictor_forward.1} parent=0 // pred_fallthru
    _
  // Predicated region
  $region22: #{meta_predictor_forward.1} parent=0 // pred_check
    _
  $region23: #{meta_predictor_forward.1} parent=0 // pred_check_branch
    %721 = sbr.rel (0) target = $region25
  $region24: #{meta_predictor_forward.1} parent=0 // pred_region
    _
  $region25: #{meta_predictor_forward.1} parent=0 // pred_fallthru
    _

</llo_original>
